<compile_context>
chip_gen: v7x
topology: tpu7x:2x2x1
jax: 0.10.0
libtpu: 0.0.40
codegen_flags: <defaults>
</compile_context>

<pallas_src>
import numpy as np

import jax
import jax.numpy as jnp
from jax.experimental import pallas as pl
from jax.experimental.pallas import tpu as pltpu


def _round_up(x: int, m: int) -> int:
    return ((x + m - 1) // m) * m


def _pad2(a, rows, cols, dtype):
    a = jnp.asarray(a)
    out = jnp.zeros((rows, cols), dtype)
    return out.at[: a.shape[0], : a.shape[1]].set(a.astype(dtype))


def _make_kernel(num_branches, is_head):
    """Kernel factory: branch structure (which branches need the con matmul)
    is known at trace time, so 'tail' never pays for an identity matmul."""
    is_head = tuple(bool(h) for h in is_head)

    def kernel(x_ref, adj_ref, w1_ref, b1_ref, con_ref, s1_ref):
        # x_ref   : [tile_n, Din]        bf16   node-embedding tile
        # adj_ref : [tile_n, tile_m]     int8   adjacency tile (0/1)
        # w1_ref  : [B, Din,  Dout_p]    bf16   linear[t] weights (x @ W layout)
        # b1_ref  : [B, 1,    Dout_p]    f32    linear[t] biases
        # con_ref : [B, Dout_p, Dout_p]  bf16   con[t] (only read for 'head')
        # s1_ref  : [B, tile_m, Dout_p]  f32    out: s1_embedd (also the
        #                                        accumulator across the n axis)
        n = pl.program_id(1)
        n_last = pl.num_programs(1) - 1

        @pl.when(n == 0)
        def _init():
            s1_ref[...] = jnp.zeros_like(s1_ref)

        # int8 -> bf16 upcast (exact for 0/1); hides under DMA/MXU.
        adj = adj_ref[...].astype(jnp.bfloat16)
        x = x_ref[...]

        for b in range(num_branches):
            # linear[t] + relu on this node tile (bf16 MXU, f32 accumulate).
            node = jnp.dot(x, w1_ref[b], preferred_element_type=jnp.float32)
            node = jnp.maximum(node + b1_ref[b], 0.0)
            # Partial hyper_embedd = adj_tile.T @ node_tile expressed as a
            # transposed-LHS dot_general (no in-kernel transpose / relayout).
            # Padded x rows give node = relu(b1) != 0, but the matching padded
            # adj rows are zero, so they contribute nothing here.
            partial = jax.lax.dot_general(
                adj, node.astype(jnp.bfloat16),
                dimension_numbers=(((0,), (0,)), ((), ())),
                preferred_element_type=jnp.float32)
            # Accumulate straight into the resident output block (no scratch).
            s1_ref[b] += partial

        @pl.when(n == n_last)
        def _finalize():
            for b in range(num_branches):
                if is_head[b]:
                    hyper = s1_ref[b]
                    s1_ref[b] = jnp.dot(hyper.astype(jnp.bfloat16), con_ref[b],
                                        preferred_element_type=jnp.float32)

    return kernel


def _device_tile_defaults():
    """Per-generation tile / VMEM-limit defaults (conservative fallback)."""
    tile_n, tile_m, vmem_limit = 1024, 1024, 32 * 1024 * 1024
    try:
        vmem = int(pltpu.get_tpu_info().vmem_capacity_bytes)
        if vmem <= 64 * 1024 * 1024:           # v7x: 64 MiB per TensorCore
            tile_n, tile_m, vmem_limit = 1024, 1024, 40 * 1024 * 1024
        else:                                  # v5e / v6e: 128 MiB
            tile_n, tile_m, vmem_limit = 2048, 1024, 64 * 1024 * 1024
    except Exception:
        pass
    return tile_n, tile_m, vmem_limit


def _shrink_to_fit(tile_n, tile_m, din, dout_p, nb, vmem_limit):
    """Rough double-buffered VMEM model; halve tiles until it fits."""
    def usage(tn, tm):
        x = 2 * tn * din * 2                                  # bf16 x tile
        a = 2 * tn * tm * 1                                   # int8 adj tile
        w = 2 * nb * (din * dout_p * 2 + dout_p * 4 + dout_p * dout_p * 2)
        o = 2 * nb * tm * dout_p * 4                          # f32 s1 block
        tmp = 4 * tn * dout_p * 4 + 2 * tm * dout_p * 4       # node/partial temps
        return x + a + w + o + tmp

    while usage(tile_n, tile_m) > 0.7 * vmem_limit and (tile_n > 256 or tile_m > 128):
        if tile_n >= tile_m and tile_n > 256:
            tile_n //= 2
        elif tile_m > 128:
            tile_m //= 2
        else:
            tile_n = max(tile_n // 2, 32)
            break
    return tile_n, tile_m


def get_con_score_fused(node_embedding, adj, params, branches, *,
                        tile_n=None, tile_m=None, vmem_limit_bytes=None):
    """Runs Get_con_score.forward for every branch in `branches` with a single
    pallas_call over x/adj: grid = (M-tile [parallel], N-tile [reduction])."""
    branches = tuple(branches)
    B = len(branches)
    node_embedding = jnp.asarray(node_embedding, jnp.float32)
    adj = jnp.asarray(adj)
    N, Din = node_embedding.shape
    N2, M = adj.shape
    assert N2 == N, "adj must be [N, M] with the node axis first"
    Dout = params[branches[0]]["w1"].shape[1]

    f32, bf16 = jnp.float32, jnp.bfloat16

    d_tn, d_tm, d_vmem = _device_tile_defaults()
    tile_n = d_tn if tile_n is None else tile_n
    tile_m = d_tm if tile_m is None else tile_m
    vmem_limit_bytes = d_vmem if vmem_limit_bytes is None else vmem_limit_bytes

    Dout_p = _round_up(Dout, 128)
    tile_n, tile_m = _shrink_to_fit(tile_n, tile_m, Din, Dout_p, B, vmem_limit_bytes)

    # M (hyperedge) axis: lane dim of the streamed adj tile -> pad to 128 and
    # split into near-equal 128-aligned tiles (grid axis 0, "parallel").
    M_p = _round_up(M, 128)
    m_tiles = int(pl.cdiv(M_p, tile_m))
    tile_m = _round_up(int(pl.cdiv(M_p, m_tiles)), 128)
    M_pp = m_tiles * tile_m

    # N (node) axis: trailing reduction grid axis; 32-aligned for int8 adj.
    N_32 = _round_up(N, 32)
    tile_n = min(_round_up(tile_n, 32), N_32)
    n_tiles = int(pl.cdiv(N_32, tile_n))
    N_pp = n_tiles * tile_n

    # N-scaled streams: x in bf16, adj in int8 (values 0/1 -> exact).
    # Invariant: padded adj ROWS (>= N) must stay zero so padded node rows
    # (which can be relu(b1) != 0) never reach the contraction.
    x_p = _pad2(node_embedding, N_pp, Din, bf16)
    adj_p = _pad2(adj, N_pp, M_pp, jnp.int8)

    # Per-branch weights stacked on a leading branch axis; padded lanes are
    # zero so they never leak into the reductions.
    w1s, b1s, cons, is_head = [], [], [], []
    for t in branches:
        p = params[t]
        w1s.append(_pad2(p["w1"], Din, Dout_p, bf16))
        b1s.append(_pad2(jnp.asarray(p["b1"]).reshape(1, -1), 1, Dout_p, f32))
        head = (t == "head")
        is_head.append(head)
        con = p["con"] if head else jnp.zeros((Dout, Dout), f32)  # never read for tail
        cons.append(_pad2(con, Dout_p, Dout_p, bf16))
    w1s = jnp.stack(w1s)
    b1s = jnp.stack(b1s)
    cons = jnp.stack(cons)

    n_heads = int(sum(is_head))
    flops = int(
        m_tiles * B * 2 * N_pp * Din * Dout_p          # x @ W1 (recomputed per M tile)
        + B * 2 * N_pp * M_pp * Dout_p                 # adj.T @ node
        + n_heads * 2 * M_pp * Dout_p * Dout_p)        # hyper @ con (head only)
    bytes_accessed = int(
        m_tiles * N_pp * Din * 2                       # bf16 x (re-read per M tile)
        + N_pp * M_pp                                  # int8 adj (read once)
        + B * (Din * Dout_p * 2 + Dout_p * 4 + Dout_p * Dout_p * 2)
        + B * M_pp * Dout_p * 4)                       # s1 output

    kernel = _make_kernel(B, is_head)

    s1_all = pl.pallas_call(
        kernel,
        out_shape=jax.ShapeDtypeStruct((B, M_pp, Dout_p), f32),
        grid=(m_tiles, n_tiles),
        in_specs=[
            pl.BlockSpec((tile_n, Din), lambda m, n: (n, 0)),
            pl.BlockSpec((tile_n, tile_m), lambda m, n: (n, m)),
            pl.BlockSpec((B, Din, Dout_p), lambda m, n: (0, 0, 0)),
            pl.BlockSpec((B, 1, Dout_p), lambda m, n: (0, 0, 0)),
            pl.BlockSpec((B, Dout_p, Dout_p), lambda m, n: (0, 0, 0)),
        ],
        out_specs=pl.BlockSpec((B, tile_m, Dout_p), lambda m, n: (0, m, 0)),
        compiler_params=pltpu.CompilerParams(
            dimension_semantics=("parallel", "arbitrary"),
            vmem_limit_bytes=int(vmem_limit_bytes)),
        cost_estimate=pl.CostEstimate(
            flops=flops, transcendentals=0, bytes_accessed=bytes_accessed),
    )(x_p, adj_p, w1s, b1s, cons)

    # Value head (linear_2[t] + sigmoid) is O(M * Dout): done in XLA from s1.
    s1, val = {}, {}
    for i, t in enumerate(branches):
        s1_t = s1_all[i, :M, :Dout]
        s1[t] = s1_t
        w2 = jnp.asarray(params[t]["w2"], f32).reshape(1, -1)
        b2 = jnp.asarray(params[t]["b2"], f32).reshape(1, 1)
        val[t] = jax.nn.sigmoid(jnp.sum(s1_t * w2, axis=-1, keepdims=True) + b2)
    return s1, val


def get_con_score(node_embedding, adj, params, t):
    """Drop-in equivalent of Get_con_score.forward(node_embedding, adj, t)."""
    s1, val = get_con_score_fused(node_embedding, adj, params, (t,))
    return s1[t], val[t]


def init_params(key, head_tail, in_dims, out_dims):
    """Deterministic (xavier-uniform-style) parameter init per head/tail key."""
    params = {}
    for i, h in enumerate(head_tail):
        k = jax.random.fold_in(key, i)
        k1, k2, k3, k4, k5 = jax.random.split(k, 5)
        lim1 = (6.0 / (in_dims + out_dims)) ** 0.5
        limc = (6.0 / (out_dims + out_dims)) ** 0.5
        lim2 = (6.0 / (out_dims + 1)) ** 0.5
        params[h] = dict(
            w1=jax.random.uniform(k1, (in_dims, out_dims), jnp.float32, -lim1, lim1),
            b1=jax.random.uniform(k4, (1, out_dims), jnp.float32, -0.1, 0.1),
            con=jax.random.uniform(k2, (out_dims, out_dims), jnp.float32, -limc, limc),
            w2=jax.random.uniform(k3, (1, out_dims), jnp.float32, -lim2, lim2),
            b2=jax.random.uniform(k5, (1, 1), jnp.float32, -0.1, 0.1),
        )
    return params


if __name__ == "__main__":
    # Small synthetic problem: N=16 nodes, M=8 hyperedges, in=32, out=32.
    N, M, IN_DIMS, OUT_DIMS = 16, 8, 32, 32
    head_tail = ["head", "tail"]

    key = jax.random.PRNGKey(0)
    k_emb, k_adj, k_par = jax.random.split(key, 3)

    node_embedding = jax.random.normal(k_emb, (N, IN_DIMS), jnp.float32)
    adj = (jax.random.uniform(k_adj, (N, M)) > 0.5).astype(jnp.float32)
    params = init_params(k_par, head_tail, IN_DIMS, OUT_DIMS)

    # Fused call: ONE pallas_call covers both branches (one pass over x/adj).
    s1_all, val_all = get_con_score_fused(node_embedding, adj, params,
                                          tuple(head_tail))
    # Single-branch API matching the torch forward signature still works.
    s1_h, v_h = get_con_score(node_embedding, adj, params, "head")
    jax.block_until_ready((tuple(s1_all.values()), tuple(val_all.values()),
                           s1_h, v_h))

    # Pure-f32 reference (matches the torch forward numerics).
    def ref_forward(x, a, p, t):
        node = jnp.maximum(x @ p["w1"] + p["b1"], 0.0)
        hyper = a.T @ node
        s1 = hyper @ p["con"] if t == "head" else hyper
        val = jax.nn.sigmoid(jnp.sum(s1 * p["w2"], axis=-1, keepdims=True)
                             + p["b2"])
        return s1, val

    for t in head_tail:
        s1_r, val_r = ref_forward(node_embedding, adj, params[t], t)
        np.testing.assert_allclose(np.asarray(s1_all[t]), np.asarray(s1_r),
                                   rtol=5e-2, atol=5e-2)
        np.testing.assert_allclose(np.asarray(val_all[t]), np.asarray(val_r),
                                   rtol=5e-2, atol=5e-2)

    assert s1_h.shape == (M, OUT_DIMS) and v_h.shape == (M, 1)
    assert s1_all["tail"].shape == (M, OUT_DIMS) and val_all["tail"].shape == (M, 1)

    print("KERNEL_OK")
</pallas_src>

<mosaic_0001>
module attributes {stable_mosaic.version = 11 : i64} {
  func.func @kernel(%arg0: i32, %arg1: i32, %arg2: memref<32x32xbf16, #tpu.memory_space<vmem>>, %arg3: memref<32x128xi8, #tpu.memory_space<vmem>>, %arg4: memref<2x32x128xbf16, #tpu.memory_space<vmem>>, %arg5: memref<2x1x128xf32, #tpu.memory_space<vmem>>, %arg6: memref<2x128x128xbf16, #tpu.memory_space<vmem>>, %arg7: memref<2x128x128xf32, #tpu.memory_space<vmem>>) attributes {dimension_semantics = [#tpu.dimension_semantics<parallel>, #tpu.dimension_semantics<arbitrary>], iteration_bounds = array<i64: 1, 1>, scalar_prefetch = 0 : i64, scratch_operands = 0 : i64, tpu.core_type = #tpu.core_type<tc>, window_params = [{transform_indices = @transform_0, window_bounds = array<i64: 32, 32>}, {transform_indices = @transform_1, window_bounds = array<i64: 32, 128>}, {pipeline_mode = #tpu.pipeline_mode<synchronous>, transform_indices = @transform_2, window_bounds = array<i64: 2, 32, 128>}, {pipeline_mode = #tpu.pipeline_mode<synchronous>, transform_indices = @transform_3, window_bounds = array<i64: 2, 1, 128>}, {pipeline_mode = #tpu.pipeline_mode<synchronous>, transform_indices = @transform_4, window_bounds = array<i64: 2, 128, 128>}, {transform_indices = @transform_5, window_bounds = array<i64: 2, 128, 128>}]} {
    %c0_i32 = arith.constant 0 : i32
    %0 = arith.cmpi eq, %arg1, %c0_i32 : i32
    %1 = arith.extui %0 : i1 to i32
    %c0_i32_0 = arith.constant 0 : i32
    %2 = arith.cmpi ne, %1, %c0_i32_0 : i32
    scf.if %2 {
      %cst_34 = arith.constant 0.000000e+00 : f32
      %43 = vector.broadcast %cst_34 : f32 to vector<2x128x128xf32>
      %c0_35 = arith.constant 0 : index
      %c0_36 = arith.constant 0 : index
      %c0_37 = arith.constant 0 : index
      %44 = vector.load %arg7[%c0_35, %c0_36, %c0_37] : memref<2x128x128xf32, #tpu.memory_space<vmem>>, vector<2x128x128xf32>
      tpu.vector_store %arg7[%c0_35, %c0_36, %c0_37], %43 {strides = array<i32>} : memref<2x128x128xf32, #tpu.memory_space<vmem>>, vector<2x128x128xf32>,
    } else {
    }
    %c0 = arith.constant 0 : index
    %c0_1 = arith.constant 0 : index
    %3 = vector.load %arg3[%c0, %c0_1] : memref<32x128xi8, #tpu.memory_space<vmem>>, vector<32x128xi8>
    %4 = arith.sitofp %3 : vector<32x128xi8> to vector<32x128xbf16>
    %c0_2 = arith.constant 0 : index
    %c0_3 = arith.constant 0 : index
    %5 = vector.load %arg2[%c0_2, %c0_3] : memref<32x32xbf16, #tpu.memory_space<vmem>>, vector<32x32xbf16>
    %c0_4 = arith.constant 0 : index
    %c0_5 = arith.constant 0 : index
    %c0_6 = arith.constant 0 : index
    %6 = vector.load %arg4[%c0_4, %c0_5, %c0_6] : memref<2x32x128xbf16, #tpu.memory_space<vmem>>, vector<1x32x128xbf16>
    %7 = vector.shape_cast %6 : vector<1x32x128xbf16> to vector<32x128xbf16>
    %cst = arith.constant dense<0.000000e+00> : vector<32x128xf32>
    %8 = tpu.matmul %5, %7, %cst {dimension_numbers = #tpu.dot_dimension_numbers<[1], [0], [0], [1], [0, 0, 1, 1], [], []>} : vector<32x32xbf16>, vector<32x128xbf16>, vector<32x128xf32> -> vector<32x128xf32>
    %c0_7 = arith.constant 0 : index
    %c0_8 = arith.constant 0 : index
    %c0_9 = arith.constant 0 : index
    %9 = vector.load %arg5[%c0_7, %c0_8, %c0_9] : memref<2x1x128xf32, #tpu.memory_space<vmem>>, vector<1x1x128xf32>
    %10 = vector.shape_cast %9 : vector<1x1x128xf32> to vector<1x128xf32>
    %11 = vector.broadcast %10 : vector<1x128xf32> to vector<32x128xf32>
    %12 = arith.addf %8, %11 : vector<32x128xf32>
    %cst_10 = arith.constant 0.000000e+00 : f32
    %13 = vector.broadcast %cst_10 : f32 to vector<32x128xf32>
    %14 = arith.maximumf %12, %13 : vector<32x128xf32>
    %15 = arith.truncf %14 : vector<32x128xf32> to vector<32x128xbf16>
    %cst_11 = arith.constant dense<0.000000e+00> : vector<128x128xf32>
    %16 = tpu.matmul %4, %15, %cst_11 {dimension_numbers = #tpu.dot_dimension_numbers<[0], [0], [1], [1], [0, 1, 1, 1], [], []>} : vector<32x128xbf16>, vector<32x128xbf16>, vector<128x128xf32> -> vector<128x128xf32>
    %c0_12 = arith.constant 0 : index
    %c0_13 = arith.constant 0 : index
    %c0_14 = arith.constant 0 : index
    %17 = vector.load %arg7[%c0_12, %c0_13, %c0_14] : memref<2x128x128xf32, #tpu.memory_space<vmem>>, vector<1x128x128xf32>
    %18 = vector.shape_cast %17 : vector<1x128x128xf32> to vector<128x128xf32>
    %19 = arith.addf %18, %16 : vector<128x128xf32>
    %c0_15 = arith.constant 0 : index
    %c0_16 = arith.constant 0 : index
    %c0_17 = arith.constant 0 : index
    %20 = vector.load %arg7[%c0_15, %c0_16, %c0_17] : memref<2x128x128xf32, #tpu.memory_space<vmem>>, vector<1x128x128xf32>
    %21 = vector.shape_cast %20 : vector<1x128x128xf32> to vector<128x128xf32>
    %22 = vector.shape_cast %19 : vector<128x128xf32> to vector<1x128x128xf32>
    tpu.vector_store %arg7[%c0_15, %c0_16, %c0_17], %22 {strides = array<i32>} : memref<2x128x128xf32, #tpu.memory_space<vmem>>, vector<1x128x128xf32>,
    %c1 = arith.constant 1 : index
    %c0_18 = arith.constant 0 : index
    %c0_19 = arith.constant 0 : index
    %23 = vector.load %arg4[%c1, %c0_18, %c0_19] : memref<2x32x128xbf16, #tpu.memory_space<vmem>>, vector<1x32x128xbf16>
    %24 = vector.shape_cast %23 : vector<1x32x128xbf16> to vector<32x128xbf16>
    %cst_20 = arith.constant dense<0.000000e+00> : vector<32x128xf32>
    %25 = tpu.matmul %5, %24, %cst_20 {dimension_numbers = #tpu.dot_dimension_numbers<[1], [0], [0], [1], [0, 0, 1, 1], [], []>} : vector<32x32xbf16>, vector<32x128xbf16>, vector<32x128xf32> -> vector<32x128xf32>
    %c1_21 = arith.constant 1 : index
    %c0_22 = arith.constant 0 : index
    %c0_23 = arith.constant 0 : index
    %26 = vector.load %arg5[%c1_21, %c0_22, %c0_23] : memref<2x1x128xf32, #tpu.memory_space<vmem>>, vector<1x1x128xf32>
    %27 = vector.shape_cast %26 : vector<1x1x128xf32> to vector<1x128xf32>
    %28 = vector.broadcast %27 : vector<1x128xf32> to vector<32x128xf32>
    %29 = arith.addf %25, %28 : vector<32x128xf32>
    %cst_24 = arith.constant 0.000000e+00 : f32
    %30 = vector.broadcast %cst_24 : f32 to vector<32x128xf32>
    %31 = arith.maximumf %29, %30 : vector<32x128xf32>
    %32 = arith.truncf %31 : vector<32x128xf32> to vector<32x128xbf16>
    %cst_25 = arith.constant dense<0.000000e+00> : vector<128x128xf32>
    %33 = tpu.matmul %4, %32, %cst_25 {dimension_numbers = #tpu.dot_dimension_numbers<[0], [0], [1], [1], [0, 1, 1, 1], [], []>} : vector<32x128xbf16>, vector<32x128xbf16>, vector<128x128xf32> -> vector<128x128xf32>
    %c1_26 = arith.constant 1 : index
    %c0_27 = arith.constant 0 : index
    %c0_28 = arith.constant 0 : index
    %34 = vector.load %arg7[%c1_26, %c0_27, %c0_28] : memref<2x128x128xf32, #tpu.memory_space<vmem>>, vector<1x128x128xf32>
    %35 = vector.shape_cast %34 : vector<1x128x128xf32> to vector<128x128xf32>
    %36 = arith.addf %35, %33 : vector<128x128xf32>
    %c1_29 = arith.constant 1 : index
    %c0_30 = arith.constant 0 : index
    %c0_31 = arith.constant 0 : index
    %37 = vector.load %arg7[%c1_29, %c0_30, %c0_31] : memref<2x128x128xf32, #tpu.memory_space<vmem>>, vector<1x128x128xf32>
    %38 = vector.shape_cast %37 : vector<1x128x128xf32> to vector<128x128xf32>
    %39 = vector.shape_cast %36 : vector<128x128xf32> to vector<1x128x128xf32>
    tpu.vector_store %arg7[%c1_29, %c0_30, %c0_31], %39 {strides = array<i32>} : memref<2x128x128xf32, #tpu.memory_space<vmem>>, vector<1x128x128xf32>,
    %c0_i32_32 = arith.constant 0 : i32
    %40 = arith.cmpi eq, %arg1, %c0_i32_32 : i32
    %41 = arith.extui %40 : i1 to i32
    %c0_i32_33 = arith.constant 0 : i32
    %42 = arith.cmpi ne, %41, %c0_i32_33 : i32
    scf.if %42 {
      %c0_34 = arith.constant 0 : index
      %c0_35 = arith.constant 0 : index
      %c0_36 = arith.constant 0 : index
      %43 = vector.load %arg7[%c0_34, %c0_35, %c0_36] : memref<2x128x128xf32, #tpu.memory_space<vmem>>, vector<1x128x128xf32>
      %44 = vector.shape_cast %43 : vector<1x128x128xf32> to vector<128x128xf32>
      %45 = arith.truncf %44 : vector<128x128xf32> to vector<128x128xbf16>
      %c0_37 = arith.constant 0 : index
      %c0_38 = arith.constant 0 : index
      %c0_39 = arith.constant 0 : index
      %46 = vector.load %arg6[%c0_37, %c0_38, %c0_39] : memref<2x128x128xbf16, #tpu.memory_space<vmem>>, vector<1x128x128xbf16>
      %47 = vector.shape_cast %46 : vector<1x128x128xbf16> to vector<128x128xbf16>
      %cst_40 = arith.constant dense<0.000000e+00> : vector<128x128xf32>
      %48 = tpu.matmul %45, %47, %cst_40 {dimension_numbers = #tpu.dot_dimension_numbers<[1], [0], [0], [1], [0, 0, 1, 1], [], []>} : vector<128x128xbf16>, vector<128x128xbf16>, vector<128x128xf32> -> vector<128x128xf32>
      %c0_41 = arith.constant 0 : index
      %c0_42 = arith.constant 0 : index
      %c0_43 = arith.constant 0 : index
      %49 = vector.load %arg7[%c0_41, %c0_42, %c0_43] : memref<2x128x128xf32, #tpu.memory_space<vmem>>, vector<1x128x128xf32>
      %50 = vector.shape_cast %49 : vector<1x128x128xf32> to vector<128x128xf32>
      %51 = vector.shape_cast %48 : vector<128x128xf32> to vector<1x128x128xf32>
      tpu.vector_store %arg7[%c0_41, %c0_42, %c0_43], %51 {strides = array<i32>} : memref<2x128x128xf32, #tpu.memory_space<vmem>>, vector<1x128x128xf32>,
    } else {
    }
    return
  }
  func.func @transform_0(%arg0: i32, %arg1: i32) -> (i32, i32) {
    %c0_i32 = arith.constant 0 : i32
    %c0_i32_0 = arith.constant 0 : i32
    return %arg1, %c0_i32 : i32, i32
  }
  func.func @transform_1(%arg0: i32, %arg1: i32) -> (i32, i32) {
    %c0_i32 = arith.constant 0 : i32
    return %arg1, %arg0 : i32, i32
  }
  func.func @transform_2(%arg0: i32, %arg1: i32) -> (i32, i32, i32) {
    %c0_i32 = arith.constant 0 : i32
    %c0_i32_0 = arith.constant 0 : i32
    %c0_i32_1 = arith.constant 0 : i32
    %c0_i32_2 = arith.constant 0 : i32
    return %c0_i32, %c0_i32_0, %c0_i32_1 : i32, i32, i32
  }
  func.func @transform_3(%arg0: i32, %arg1: i32) -> (i32, i32, i32) {
    %c0_i32 = arith.constant 0 : i32
    %c0_i32_0 = arith.constant 0 : i32
    %c0_i32_1 = arith.constant 0 : i32
    %c0_i32_2 = arith.constant 0 : i32
    return %c0_i32, %c0_i32_0, %c0_i32_1 : i32, i32, i32
  }
  func.func @transform_4(%arg0: i32, %arg1: i32) -> (i32, i32, i32) {
    %c0_i32 = arith.constant 0 : i32
    %c0_i32_0 = arith.constant 0 : i32
    %c0_i32_1 = arith.constant 0 : i32
    %c0_i32_2 = arith.constant 0 : i32
    return %c0_i32, %c0_i32_0, %c0_i32_1 : i32, i32, i32
  }
  func.func @transform_5(%arg0: i32, %arg1: i32) -> (i32, i32, i32) {
    %c0_i32 = arith.constant 0 : i32
    %c0_i32_0 = arith.constant 0 : i32
    %c0_i32_1 = arith.constant 0 : i32
    return %c0_i32, %arg0, %c0_i32_0 : i32, i32, i32
  }
}

</mosaic_0001>

<llo_original>
// kernel: tpu_custom_call.1
$region0: #{tpu_custom_call.1}
  #allocation0 [shape = 'u32[]', space=smem, size = 0x4, offset = 0x4, fixed_abs, tag = 'smem constant byte address 0x4 - core index']
  #allocation1 [shape = 'u32[144,128]{1,0:T(1,128)}', space=vmem, size = 0x12000, scoped, tag = 'internal scratch']
  %s0 = inlined_call_operand.hbm [shape: bf16[32,32], index: 0, kind: input, shape index: {}]
  %s1 = inlined_call_operand.hbm [shape: s8[32,128], index: 1, kind: input, shape index: {}]
  %s2 = inlined_call_operand.hbm [shape: bf16[2,32,128], index: 2, kind: input, shape index: {}]
  %s3 = inlined_call_operand.vmem [shape: f32[2,1,128], index: 3, kind: input, shape index: {}]
  %s4 = inlined_call_operand.hbm [shape: bf16[2,128,128], index: 4, kind: input, shape index: {}]
  %s5 = inlined_call_operand.hbm [shape: f32[2,128,128], index: 5, kind: output, shape index: {}]
  %s6 = sld [smem:[#allocation0]]
  $region54: #{tpu_custom_call.1} parent=0
    _
  %s8 = ssub.s32 1, %s6
  %s9 = scalar_select 0, %s8, %s6
  $region1: #{tpu_custom_call.1} parent=0
    #allocation2 [shape = 'u8[8192]{0}', space=vmem, size = 0x2000, scoped, tag = 'input window, operand 0, single buffered']
    #allocation3 [shape = 's32[1]{0}', space=sflag, size = 0x4, scoped, tag = 'scoped memory for tpu_custom_call.1']
    #allocation4 [shape = 's32[1]{0}', space=sflag, size = 0x4, scoped, tag = 'scoped memory for tpu_custom_call.1']
    #allocation5 [shape = 'u8[4096]{0}', space=vmem, size = 0x1000, scoped, tag = 'input window, operand 1, single buffered']
    #allocation6 [shape = 's32[1]{0}', space=sflag, size = 0x4, scoped, tag = 'scoped memory for tpu_custom_call.1']
    #allocation7 [shape = 'u8[16384]{0}', space=vmem, size = 0x4000, scoped, tag = 'input window, operand 2, single buffered']
    #allocation8 [shape = 'u8[65536]{0}', space=vmem, size = 0x10000, scoped, tag = 'input window, operand 4, single buffered']
    #allocation9 [shape = 's32[1]{0}', space=sflag, size = 0x4, scoped, tag = 'scoped memory for tpu_custom_call.1']
    #allocation10 [shape = 'u8[131072]{0}', space=vmem, size = 0x20000, scoped, tag = 'output window, operand 0, single buffered']
    %10 = vsyncpa [#allocation3], 0
    %11 = vsyncpa [#allocation6], 0
    %12 = vsyncpa [#allocation9], 0
    %13 = vsyncpa [#allocation4], 0
    // Predicated region
    $region2: #{tpu_custom_call.1} parent=1 // pred_check
      _
    $region3: #{tpu_custom_call.1} parent=1 // pred_check_branch
      %15 = sbr.rel (0) target = $region5
    $region4: #{tpu_custom_call.1} parent=1 // pred_region
      %s17 = ssub.s32 256, 256
      %18 = vsyncadd [#allocation3], %s17
      %s19 = sshll.u32 [#allocation2], 4
      %s20 = int_to_ptr.vmem [resolvable:$true] %s19
      %25 = dma.hbm_to_vmem [thread:$0]  %s0, 256, %s20, [#allocation3], 64, 64, 4
    $region5: #{tpu_custom_call.1} parent=1 // pred_fallthru
      _
    // Predicated region
    $region6: #{tpu_custom_call.1} parent=1 // pred_check
      _
    $region7: #{tpu_custom_call.1} parent=1 // pred_check_branch
      %27 = sbr.rel (0) target = $region9
    $region8: #{tpu_custom_call.1} parent=1 // pred_region
      %s29 = ssub.s32 128, 128
      %30 = vsyncadd [#allocation6], %s29
      %s32 = sshll.u32 [#allocation5], 4
      %s33 = int_to_ptr.vmem [resolvable:$true] %s32
      %35 = dma.hbm_to_vmem [thread:$0]  %s1, 128, %s33, [#allocation6]
    $region9: #{tpu_custom_call.1} parent=1 // pred_fallthru
      _
    // Predicated region
    $region10: #{tpu_custom_call.1} parent=1 // pred_check
      _
    $region11: #{tpu_custom_call.1} parent=1 // pred_check_branch
      %37 = sbr.rel (0) target = $region13
    $region12: #{tpu_custom_call.1} parent=1 // pred_region
      %s39 = ssub.s32 512, 512
      %40 = vsyncadd [#allocation6], %s39
      %s41 = sshll.u32 [#allocation7], 4
      %s42 = int_to_ptr.vmem [resolvable:$true] %s41
      %47 = dma.hbm_to_vmem [thread:$0]  %s2, 512, %s42, [#allocation6], 64, 64, 4
    $region13: #{tpu_custom_call.1} parent=1 // pred_fallthru
      _
    // Predicated region
    $region14: #{tpu_custom_call.1} parent=1 // pred_check
      _
    $region15: #{tpu_custom_call.1} parent=1 // pred_check_branch
      %49 = sbr.rel (0) target = $region17
    $region16: #{tpu_custom_call.1} parent=1 // pred_region
      _
    $region17: #{tpu_custom_call.1} parent=1 // pred_fallthru
      _
    // Predicated region
    $region18: #{tpu_custom_call.1} parent=1 // pred_check
      _
    $region19: #{tpu_custom_call.1} parent=1 // pred_check_branch
      %51 = sbr.rel (0) target = $region21
    $region20: #{tpu_custom_call.1} parent=1 // pred_region
      %s53 = ssub.s32 2048, 2048
      %54 = vsyncadd [#allocation9], %s53
      %s55 = sshll.u32 [#allocation8], 4
      %s56 = int_to_ptr.vmem [resolvable:$true] %s55
      %61 = dma.hbm_to_vmem [thread:$0]  %s4, 2048, %s56, [#allocation9], 64, 64, 4
    $region21: #{tpu_custom_call.1} parent=1 // pred_fallthru
      _
    // Predicated region
    $region22: #{tpu_custom_call.1} parent=1 // pred_check
      _
    $region23: #{tpu_custom_call.1} parent=1 // pred_check_branch
      %63 = sbr.rel (0) target = $region25
    $region24: #{tpu_custom_call.1} parent=1 // pred_region
      %64 = dma.done [#allocation3], 256
    $region25: #{tpu_custom_call.1} parent=1 // pred_fallthru
      _
    // Predicated region
    $region26: #{tpu_custom_call.1} parent=1 // pred_check
      _
    $region27: #{tpu_custom_call.1} parent=1 // pred_check_branch
      %66 = sbr.rel (0) target = $region29
    $region28: #{tpu_custom_call.1} parent=1 // pred_region
      %67 = dma.done [#allocation6], 128
    $region29: #{tpu_custom_call.1} parent=1 // pred_fallthru
      _
    // Predicated region
    $region30: #{tpu_custom_call.1} parent=1 // pred_check
      _
    $region31: #{tpu_custom_call.1} parent=1 // pred_check_branch
      %69 = sbr.rel (0) target = $region33
    $region32: #{tpu_custom_call.1} parent=1 // pred_region
      %70 = dma.done [#allocation6], 512
    $region33: #{tpu_custom_call.1} parent=1 // pred_fallthru
      _
    // Predicated region
    $region34: #{tpu_custom_call.1} parent=1 // pred_check
      _
    $region35: #{tpu_custom_call.1} parent=1 // pred_check_branch
      %72 = sbr.rel (0) target = $region37
    $region36: #{tpu_custom_call.1} parent=1 // pred_region
      %73 = dma.done [#allocation9], 2048
    $region37: #{tpu_custom_call.1} parent=1 // pred_fallthru
      _
    %p75 = scmp.eq.s32.totalorder 0, 0
    // Predicated region
    $region38: #{tpu_custom_call.1} parent=1 // pred_check
      %p76 = pneg %p75
    $region39: #{tpu_custom_call.1} parent=1 // pred_check_branch
      %78 = sbr.rel (%p76) target = $region41
    $region40: #{tpu_custom_call.1} parent=1 // pred_region
      %79 = vst [vmem:[#allocation10] sm:$0xff] 0.0
      %80 = vst [vmem:[#allocation10 + $0x8] sm:$0xff] 0.0
      %81 = vst [vmem:[#allocation10 + $0x10] sm:$0xff] 0.0
      %82 = vst [vmem:[#allocation10 + $0x18] sm:$0xff] 0.0
      %83 = vst [vmem:[#allocation10 + $0x20] sm:$0xff] 0.0
      %84 = vst [vmem:[#allocation10 + $0x28] sm:$0xff] 0.0
      %85 = vst [vmem:[#allocation10 + $0x30] sm:$0xff] 0.0
      %86 = vst [vmem:[#allocation10 + $0x38] sm:$0xff] 0.0
      %87 = vst [vmem:[#allocation10 + $0x40] sm:$0xff] 0.0
      %88 = vst [vmem:[#allocation10 + $0x48] sm:$0xff] 0.0
      %89 = vst [vmem:[#allocation10 + $0x50] sm:$0xff] 0.0
      %90 = vst [vmem:[#allocation10 + $0x58] sm:$0xff] 0.0
      %91 = vst [vmem:[#allocation10 + $0x60] sm:$0xff] 0.0
      %92 = vst [vmem:[#allocation10 + $0x68] sm:$0xff] 0.0
      %93 = vst [vmem:[#allocation10 + $0x70] sm:$0xff] 0.0
      %94 = vst [vmem:[#allocation10 + $0x78] sm:$0xff] 0.0
      %95 = vst [vmem:[#allocation10 + $0x80] sm:$0xff] 0.0
      %96 = vst [vmem:[#allocation10 + $0x88] sm:$0xff] 0.0
      %97 = vst [vmem:[#allocation10 + $0x90] sm:$0xff] 0.0
      %98 = vst [vmem:[#allocation10 + $0x98] sm:$0xff] 0.0
      %99 = vst [vmem:[#allocation10 + $0xa0] sm:$0xff] 0.0
      %100 = vst [vmem:[#allocation10 + $0xa8] sm:$0xff] 0.0
      %101 = vst [vmem:[#allocation10 + $0xb0] sm:$0xff] 0.0
      %102 = vst [vmem:[#allocation10 + $0xb8] sm:$0xff] 0.0
      %103 = vst [vmem:[#allocation10 + $0xc0] sm:$0xff] 0.0
      %104 = vst [vmem:[#allocation10 + $0xc8] sm:$0xff] 0.0
      %105 = vst [vmem:[#allocation10 + $0xd0] sm:$0xff] 0.0
      %106 = vst [vmem:[#allocation10 + $0xd8] sm:$0xff] 0.0
      %107 = vst [vmem:[#allocation10 + $0xe0] sm:$0xff] 0.0
      %108 = vst [vmem:[#allocation10 + $0xe8] sm:$0xff] 0.0
      %109 = vst [vmem:[#allocation10 + $0xf0] sm:$0xff] 0.0
      %110 = vst [vmem:[#allocation10 + $0xf8] sm:$0xff] 0.0
    $region41: #{tpu_custom_call.1} parent=1 // pred_fallthru
      _
    %v111 = vld [vmem:[#allocation5] sm:$0xff]
    %v112 = vunpack.c.l.s8.bf16 %v111
    %v113 = vunpack.c.h.s8.bf16 %v111
    %v114 = vld [vmem:[#allocation2] sm:$0xf]
    %v115 = vld [vmem:[#allocation2 + $0x4] sm:$0xf]
    %v116 = vld [vmem:[#allocation2 + $0x8] sm:$0xf]
    %v117 = vld [vmem:[#allocation2 + $0xc] sm:$0xf]
    %v118 = vld [vmem:[#allocation7] sm:$0xf]
    %v119 = vld [vmem:[#allocation7 + $0x4] sm:$0xf]
    %v120 = vld [vmem:[#allocation7 + $0x8] sm:$0xf]
    %v121 = vld [vmem:[#allocation7 + $0xc] sm:$0xf]
    %v122 = vld [vmem:[%s3] sm:$0x1]
    %v124 = vlaneseq
    %v125 = vshrl.u32 %v124, 7
    %v126 = vsub.s32 0, %v125
    %v127 = vrot.slane %v122, %v126
    %v133 = vunpack.c.l.b16 %v114
    %v134 = vunpack.c.l.b16 %v115
    %v135 = vunpack.c.l.b16 %v116
    %v136 = vunpack.c.l.b16 %v117
    %v137 = vpack.c.b16 %v134, %v133
    %v138 = vpack.c.b16 %v136, %v135
    %v143 = vunpack.c.l.b16 %v118
    %v144 = vunpack.c.l.b16 %v119
    %v145 = vunpack.c.l.b16 %v120
    %v146 = vunpack.c.l.b16 %v121
    %v147 = vpack.c.b16 %v144, %v143
    %v148 = vpack.c.b16 %v146, %v145
    %vm151 = vcmask 261120
    %v153 = vsel %vm151, %v137, 0
    %v156 = vsel %vm151, %v138, 0
    %158 = vmatprep.subr.bf16.mxu0 0
    %159 = vmatpush1.bf16.msra.mxu0 %v147
    %160 = vmatprep.subr.bf16.mxu0 0
    %161 = vmatpush1.bf16.msra.mxu0 %v148
    %162 = vmatprep.subr.bf16.mxu0 0
    %163 = vmatpush1.bf16.msra.mxu0 0
    %164 = vmatprep.subr.bf16.mxu0 0
    %165 = vmatpush1.bf16.msra.mxu0 0
    %166 = vmatprep.subr.bf16.mxu0 0
    %167 = vmatpush1.bf16.msra.mxu0 0
    %168 = vmatprep.subr.bf16.mxu0 0
    %169 = vmatpush1.bf16.msra.mxu0 0
    %170 = vmatprep.subr.bf16.mxu0 0
    %171 = vmatpush1.bf16.msra.mxu0 0
    %172 = vmatprep.subr.bf16.mxu0 0
    %173 = vmatpush1.bf16.msra.mxu0 0
    %174 = vmatprep.subr.bf16.mxu0 0
    %175 = vmatpush1.bf16.msra.mxu0 0
    %176 = vmatprep.subr.bf16.mxu0 0
    %177 = vmatpush1.bf16.msra.mxu0 0
    %178 = vmatprep.subr.bf16.mxu0 0
    %179 = vmatpush1.bf16.msra.mxu0 0
    %180 = vmatprep.subr.bf16.mxu0 0
    %181 = vmatpush1.bf16.msra.mxu0 0
    %182 = vmatprep.subr.bf16.mxu0 0
    %183 = vmatpush1.bf16.msra.mxu0 0
    %184 = vmatprep.subr.bf16.mxu0 0
    %185 = vmatpush1.bf16.msra.mxu0 0
    %186 = vmatprep.subr.bf16.mxu0 0
    %187 = vmatpush1.bf16.msra.mxu0 0
    %188 = vmatprep.subr.bf16.mxu0 0
    %189 = vmatpush1.bf16.msra.mxu0 0
    %190 = vmatprep.mubr.bf16.mxu0 0
    %191 = vmatmul.mubr.bf16.gmra.mrb[0].mxu0 %v153
    %v192 = vpop.f32.mrb[0].mxu0
    %v193 = vadd.f32 %v127, %v192
    %v194 = vpop.f32.mrb[0].mxu0
    %v195 = vpop.f32.mrb[0].mxu0
    %v196 = vadd.f32 %v127, %v195
    %v197 = vpop.f32.mrb[0].mxu0
    %198 = vmatprep.mubr.bf16.mxu0 0
    %199 = vmatmul.mubr.bf16.gmra.mrb[0].mxu0 %v156
    %v200 = vpop.f32.mrb[0].mxu0
    %v201 = vadd.f32 %v127, %v200
    %v202 = vpop.f32.mrb[0].mxu0
    %v203 = vpop.f32.mrb[0].mxu0
    %v204 = vadd.f32 %v127, %v203
    %v205 = vpop.f32.mrb[0].mxu0
    %206 = vdwg.mxu0
    %v207 = vmax.f32 %v193, 0.0
    %v208 = vmax.f32 %v196, 0.0
    %v209 = vmax.f32 %v201, 0.0
    %v210 = vmax.f32 %v204, 0.0
    %v211 = vpack.c.bf16 %v208, %v207
    %v212 = vpack.c.bf16 %v210, %v209
    %213 = vxpose.xlu0.c.b16.start [1/8] %v112, 128
    %214 = vxpose.xlu0.c.b16.cont [2/8] %v113, 128
    %215 = vxpose.xlu0.c.b16.cont [3/8] 0, 128
    %216 = vxpose.xlu0.c.b16.cont [4/8] 0, 128
    %217 = vxpose.xlu0.c.b16.cont [5/8] 0, 128
    %218 = vxpose.xlu0.c.b16.cont [6/8] 0, 128
    %219 = vxpose.xlu0.c.b16.cont [7/8] 0, 128
    %220 = vxpose.xlu0.c.b16.end [8/8] 0, 128
    %v221 = vpop.trf.xlu0
    %v222 = vpop.trf.xlu0
    %v223 = vpop.trf.xlu0
    %v224 = vpop.trf.xlu0
    %v225 = vpop.trf.xlu0
    %v226 = vpop.trf.xlu0
    %v227 = vpop.trf.xlu0
    %v228 = vpop.trf.xlu0
    %v230 = vsel %vm151, %v221, 0
    %v233 = vsel %vm151, %v222, 0
    %v236 = vsel %vm151, %v223, 0
    %v239 = vsel %vm151, %v224, 0
    %v242 = vsel %vm151, %v225, 0
    %v245 = vsel %vm151, %v226, 0
    %v248 = vsel %vm151, %v227, 0
    %v251 = vsel %vm151, %v228, 0
    %253 = vmatprep.subr.bf16.mxu0 0
    %254 = vmatpush1.bf16.msra.mxu0 %v211
    %255 = vmatprep.subr.bf16.mxu0 0
    %256 = vmatpush1.bf16.msra.mxu0 %v212
    %257 = vmatprep.subr.bf16.mxu0 0
    %258 = vmatpush1.bf16.msra.mxu0 0
    %259 = vmatprep.subr.bf16.mxu0 0
    %260 = vmatpush1.bf16.msra.mxu0 0
    %261 = vmatprep.subr.bf16.mxu0 0
    %262 = vmatpush1.bf16.msra.mxu0 0
    %263 = vmatprep.subr.bf16.mxu0 0
    %264 = vmatpush1.bf16.msra.mxu0 0
    %265 = vmatprep.subr.bf16.mxu0 0
    %266 = vmatpush1.bf16.msra.mxu0 0
    %267 = vmatprep.subr.bf16.mxu0 0
    %268 = vmatpush1.bf16.msra.mxu0 0
    %269 = vmatprep.subr.bf16.mxu0 0
    %270 = vmatpush1.bf16.msra.mxu0 0
    %271 = vmatprep.subr.bf16.mxu0 0
    %272 = vmatpush1.bf16.msra.mxu0 0
    %273 = vmatprep.subr.bf16.mxu0 0
    %274 = vmatpush1.bf16.msra.mxu0 0
    %275 = vmatprep.subr.bf16.mxu0 0
    %276 = vmatpush1.bf16.msra.mxu0 0
    %277 = vmatprep.subr.bf16.mxu0 0
    %278 = vmatpush1.bf16.msra.mxu0 0
    %279 = vmatprep.subr.bf16.mxu0 0
    %280 = vmatpush1.bf16.msra.mxu0 0
    %281 = vmatprep.subr.bf16.mxu0 0
    %282 = vmatpush1.bf16.msra.mxu0 0
    %283 = vmatprep.subr.bf16.mxu0 0
    %284 = vmatpush1.bf16.msra.mxu0 0
    %285 = vmatprep.mubr.bf16.mxu0 0
    %286 = vmatmul.mubr.bf16.gmra.mrb[0].mxu0 %v230
    %v287 = vpop.f32.mrb[0].mxu0
    %v288 = vadd.f32 0.0, %v287
    %v289 = vpop.f32.mrb[0].mxu0
    %v290 = vpop.f32.mrb[0].mxu0
    %v291 = vadd.f32 0.0, %v290
    %v292 = vpop.f32.mrb[0].mxu0
    %293 = vmatprep.mubr.bf16.mxu0 0
    %294 = vmatmul.mubr.bf16.gmra.mrb[0].mxu0 %v233
    %v295 = vpop.f32.mrb[0].mxu0
    %v296 = vadd.f32 0.0, %v295
    %v297 = vpop.f32.mrb[0].mxu0
    %v298 = vpop.f32.mrb[0].mxu0
    %v299 = vadd.f32 0.0, %v298
    %v300 = vpop.f32.mrb[0].mxu0
    %301 = vmatprep.mubr.bf16.mxu0 0
    %302 = vmatmul.mubr.bf16.gmra.mrb[0].mxu0 %v236
    %v303 = vpop.f32.mrb[0].mxu0
    %v304 = vadd.f32 0.0, %v303
    %v305 = vpop.f32.mrb[0].mxu0
    %v306 = vpop.f32.mrb[0].mxu0
    %v307 = vadd.f32 0.0, %v306
    %v308 = vpop.f32.mrb[0].mxu0
    %309 = vmatprep.mubr.bf16.mxu0 0
    %310 = vmatmul.mubr.bf16.gmra.mrb[0].mxu0 %v239
    %v311 = vpop.f32.mrb[0].mxu0
    %v312 = vadd.f32 0.0, %v311
    %v313 = vpop.f32.mrb[0].mxu0
    %v314 = vpop.f32.mrb[0].mxu0
    %v315 = vadd.f32 0.0, %v314
    %v316 = vpop.f32.mrb[0].mxu0
    %317 = vmatprep.mubr.bf16.mxu0 0
    %318 = vmatmul.mubr.bf16.gmra.mrb[0].mxu0 %v242
    %v319 = vpop.f32.mrb[0].mxu0
    %v320 = vadd.f32 0.0, %v319
    %v321 = vpop.f32.mrb[0].mxu0
    %v322 = vpop.f32.mrb[0].mxu0
    %v323 = vadd.f32 0.0, %v322
    %v324 = vpop.f32.mrb[0].mxu0
    %325 = vmatprep.mubr.bf16.mxu0 0
    %326 = vmatmul.mubr.bf16.gmra.mrb[0].mxu0 %v245
    %v327 = vpop.f32.mrb[0].mxu0
    %v328 = vadd.f32 0.0, %v327
    %v329 = vpop.f32.mrb[0].mxu0
    %v330 = vpop.f32.mrb[0].mxu0
    %v331 = vadd.f32 0.0, %v330
    %v332 = vpop.f32.mrb[0].mxu0
    %333 = vmatprep.mubr.bf16.mxu0 0
    %334 = vmatmul.mubr.bf16.gmra.mrb[0].mxu0 %v248
    %v335 = vpop.f32.mrb[0].mxu0
    %v336 = vadd.f32 0.0, %v335
    %v337 = vpop.f32.mrb[0].mxu0
    %v338 = vpop.f32.mrb[0].mxu0
    %v339 = vadd.f32 0.0, %v338
    %v340 = vpop.f32.mrb[0].mxu0
    %341 = vmatprep.mubr.bf16.mxu0 0
    %342 = vmatmul.mubr.bf16.gmra.mrb[0].mxu0 %v251
    %v343 = vpop.f32.mrb[0].mxu0
    %v344 = vadd.f32 0.0, %v343
    %v345 = vpop.f32.mrb[0].mxu0
    %v346 = vpop.f32.mrb[0].mxu0
    %v347 = vadd.f32 0.0, %v346
    %v348 = vpop.f32.mrb[0].mxu0
    %349 = vdwg.mxu0
    %v350 = vld [vmem:[#allocation10] sm:$0xff]
    %v351 = vld [vmem:[#allocation10 + $0x8] sm:$0xff]
    %v352 = vld [vmem:[#allocation10 + $0x10] sm:$0xff]
    %v353 = vld [vmem:[#allocation10 + $0x18] sm:$0xff]
    %v354 = vld [vmem:[#allocation10 + $0x20] sm:$0xff]
    %v355 = vld [vmem:[#allocation10 + $0x28] sm:$0xff]
    %v356 = vld [vmem:[#allocation10 + $0x30] sm:$0xff]
    %v357 = vld [vmem:[#allocation10 + $0x38] sm:$0xff]
    %v358 = vld [vmem:[#allocation10 + $0x40] sm:$0xff]
    %v359 = vld [vmem:[#allocation10 + $0x48] sm:$0xff]
    %v360 = vld [vmem:[#allocation10 + $0x50] sm:$0xff]
    %v361 = vld [vmem:[#allocation10 + $0x58] sm:$0xff]
    %v362 = vld [vmem:[#allocation10 + $0x60] sm:$0xff]
    %v363 = vld [vmem:[#allocation10 + $0x68] sm:$0xff]
    %v364 = vld [vmem:[#allocation10 + $0x70] sm:$0xff]
    %v365 = vld [vmem:[#allocation10 + $0x78] sm:$0xff]
    %v366 = vadd.f32 %v350, %v288
    %v367 = vadd.f32 %v351, %v291
    %v368 = vadd.f32 %v352, %v296
    %v369 = vadd.f32 %v353, %v299
    %v370 = vadd.f32 %v354, %v304
    %v371 = vadd.f32 %v355, %v307
    %v372 = vadd.f32 %v356, %v312
    %v373 = vadd.f32 %v357, %v315
    %v374 = vadd.f32 %v358, %v320
    %v375 = vadd.f32 %v359, %v323
    %v376 = vadd.f32 %v360, %v328
    %v377 = vadd.f32 %v361, %v331
    %v378 = vadd.f32 %v362, %v336
    %v379 = vadd.f32 %v363, %v339
    %v380 = vadd.f32 %v364, %v344
    %v381 = vadd.f32 %v365, %v347
    %382 = vst [vmem:[#allocation10] sm:$0xff] %v366
    %383 = vst [vmem:[#allocation10 + $0x8] sm:$0xff] %v367
    %384 = vst [vmem:[#allocation10 + $0x10] sm:$0xff] %v368
    %385 = vst [vmem:[#allocation10 + $0x18] sm:$0xff] %v369
    %386 = vst [vmem:[#allocation10 + $0x20] sm:$0xff] %v370
    %387 = vst [vmem:[#allocation10 + $0x28] sm:$0xff] %v371
    %388 = vst [vmem:[#allocation10 + $0x30] sm:$0xff] %v372
    %389 = vst [vmem:[#allocation10 + $0x38] sm:$0xff] %v373
    %390 = vst [vmem:[#allocation10 + $0x40] sm:$0xff] %v374
    %391 = vst [vmem:[#allocation10 + $0x48] sm:$0xff] %v375
    %392 = vst [vmem:[#allocation10 + $0x50] sm:$0xff] %v376
    %393 = vst [vmem:[#allocation10 + $0x58] sm:$0xff] %v377
    %394 = vst [vmem:[#allocation10 + $0x60] sm:$0xff] %v378
    %395 = vst [vmem:[#allocation10 + $0x68] sm:$0xff] %v379
    %396 = vst [vmem:[#allocation10 + $0x70] sm:$0xff] %v380
    %397 = vst [vmem:[#allocation10 + $0x78] sm:$0xff] %v381
    %s398 = scalar_lea.vmem [#allocation7], 16
    %v399 = vld [vmem:[%s398] sm:$0xf]
    %v400 = vld [vmem:[%s398 + $0x4] sm:$0xf]
    %v401 = vld [vmem:[%s398 + $0x8] sm:$0xf]
    %v402 = vld [vmem:[%s398 + $0xc] sm:$0xf]
    %s403 = scalar_lea.vmem %s3, 1
    %v404 = vld [vmem:[%s403] sm:$0x1]
    %v406 = vlaneseq
    %v407 = vshrl.u32 %v406, 7
    %v408 = vsub.s32 0, %v407
    %v409 = vrot.slane %v404, %v408
    %v415 = vunpack.c.l.b16 %v399
    %v416 = vunpack.c.l.b16 %v400
    %v417 = vunpack.c.l.b16 %v401
    %v418 = vunpack.c.l.b16 %v402
    %v419 = vpack.c.b16 %v416, %v415
    %v420 = vpack.c.b16 %v418, %v417
    %423 = vmatprep.subr.bf16.mxu0 0
    %424 = vmatpush1.bf16.msra.mxu0 %v419
    %425 = vmatprep.subr.bf16.mxu0 0
    %426 = vmatpush1.bf16.msra.mxu0 %v420
    %427 = vmatprep.subr.bf16.mxu0 0
    %428 = vmatpush1.bf16.msra.mxu0 0
    %429 = vmatprep.subr.bf16.mxu0 0
    %430 = vmatpush1.bf16.msra.mxu0 0
    %431 = vmatprep.subr.bf16.mxu0 0
    %432 = vmatpush1.bf16.msra.mxu0 0
    %433 = vmatprep.subr.bf16.mxu0 0
    %434 = vmatpush1.bf16.msra.mxu0 0
    %435 = vmatprep.subr.bf16.mxu0 0
    %436 = vmatpush1.bf16.msra.mxu0 0
    %437 = vmatprep.subr.bf16.mxu0 0
    %438 = vmatpush1.bf16.msra.mxu0 0
    %439 = vmatprep.subr.bf16.mxu0 0
    %440 = vmatpush1.bf16.msra.mxu0 0
    %441 = vmatprep.subr.bf16.mxu0 0
    %442 = vmatpush1.bf16.msra.mxu0 0
    %443 = vmatprep.subr.bf16.mxu0 0
    %444 = vmatpush1.bf16.msra.mxu0 0
    %445 = vmatprep.subr.bf16.mxu0 0
    %446 = vmatpush1.bf16.msra.mxu0 0
    %447 = vmatprep.subr.bf16.mxu0 0
    %448 = vmatpush1.bf16.msra.mxu0 0
    %449 = vmatprep.subr.bf16.mxu0 0
    %450 = vmatpush1.bf16.msra.mxu0 0
    %451 = vmatprep.subr.bf16.mxu0 0
    %452 = vmatpush1.bf16.msra.mxu0 0
    %453 = vmatprep.subr.bf16.mxu0 0
    %454 = vmatpush1.bf16.msra.mxu0 0
    %455 = vmatprep.mubr.bf16.mxu0 0
    %456 = vmatmul.mubr.bf16.gmra.mrb[0].mxu0 %v153
    %v457 = vpop.f32.mrb[0].mxu0
    %v458 = vadd.f32 %v409, %v457
    %v459 = vpop.f32.mrb[0].mxu0
    %v460 = vpop.f32.mrb[0].mxu0
    %v461 = vadd.f32 %v409, %v460
    %v462 = vpop.f32.mrb[0].mxu0
    %463 = vmatprep.mubr.bf16.mxu0 0
    %464 = vmatmul.mubr.bf16.gmra.mrb[0].mxu0 %v156
    %v465 = vpop.f32.mrb[0].mxu0
    %v466 = vadd.f32 %v409, %v465
    %v467 = vpop.f32.mrb[0].mxu0
    %v468 = vpop.f32.mrb[0].mxu0
    %v469 = vadd.f32 %v409, %v468
    %v470 = vpop.f32.mrb[0].mxu0
    %471 = vdwg.mxu0
    %v472 = vmax.f32 %v458, 0.0
    %v473 = vmax.f32 %v461, 0.0
    %v474 = vmax.f32 %v466, 0.0
    %v475 = vmax.f32 %v469, 0.0
    %v476 = vpack.c.bf16 %v473, %v472
    %v477 = vpack.c.bf16 %v475, %v474
    %478 = vmatprep.subr.bf16.mxu0 0
    %479 = vmatpush1.bf16.msra.mxu0 %v476
    %480 = vmatprep.subr.bf16.mxu0 0
    %481 = vmatpush1.bf16.msra.mxu0 %v477
    %482 = vmatprep.subr.bf16.mxu0 0
    %483 = vmatpush1.bf16.msra.mxu0 0
    %484 = vmatprep.subr.bf16.mxu0 0
    %485 = vmatpush1.bf16.msra.mxu0 0
    %486 = vmatprep.subr.bf16.mxu0 0
    %487 = vmatpush1.bf16.msra.mxu0 0
    %488 = vmatprep.subr.bf16.mxu0 0
    %489 = vmatpush1.bf16.msra.mxu0 0
    %490 = vmatprep.subr.bf16.mxu0 0
    %491 = vmatpush1.bf16.msra.mxu0 0
    %492 = vmatprep.subr.bf16.mxu0 0
    %493 = vmatpush1.bf16.msra.mxu0 0
    %494 = vmatprep.subr.bf16.mxu0 0
    %495 = vmatpush1.bf16.msra.mxu0 0
    %496 = vmatprep.subr.bf16.mxu0 0
    %497 = vmatpush1.bf16.msra.mxu0 0
    %498 = vmatprep.subr.bf16.mxu0 0
    %499 = vmatpush1.bf16.msra.mxu0 0
    %500 = vmatprep.subr.bf16.mxu0 0
    %501 = vmatpush1.bf16.msra.mxu0 0
    %502 = vmatprep.subr.bf16.mxu0 0
    %503 = vmatpush1.bf16.msra.mxu0 0
    %504 = vmatprep.subr.bf16.mxu0 0
    %505 = vmatpush1.bf16.msra.mxu0 0
    %506 = vmatprep.subr.bf16.mxu0 0
    %507 = vmatpush1.bf16.msra.mxu0 0
    %508 = vmatprep.subr.bf16.mxu0 0
    %509 = vmatpush1.bf16.msra.mxu0 0
    %510 = vmatprep.mubr.bf16.mxu0 0
    %511 = vmatmul.mubr.bf16.gmra.mrb[0].mxu0 %v230
    %v512 = vpop.f32.mrb[0].mxu0
    %v513 = vadd.f32 0.0, %v512
    %v514 = vpop.f32.mrb[0].mxu0
    %v515 = vpop.f32.mrb[0].mxu0
    %v516 = vadd.f32 0.0, %v515
    %v517 = vpop.f32.mrb[0].mxu0
    %518 = vmatprep.mubr.bf16.mxu0 0
    %519 = vmatmul.mubr.bf16.gmra.mrb[0].mxu0 %v233
    %v520 = vpop.f32.mrb[0].mxu0
    %v521 = vadd.f32 0.0, %v520
    %v522 = vpop.f32.mrb[0].mxu0
    %v523 = vpop.f32.mrb[0].mxu0
    %v524 = vadd.f32 0.0, %v523
    %v525 = vpop.f32.mrb[0].mxu0
    %526 = vmatprep.mubr.bf16.mxu0 0
    %527 = vmatmul.mubr.bf16.gmra.mrb[0].mxu0 %v236
    %v528 = vpop.f32.mrb[0].mxu0
    %v529 = vadd.f32 0.0, %v528
    %v530 = vpop.f32.mrb[0].mxu0
    %v531 = vpop.f32.mrb[0].mxu0
    %v532 = vadd.f32 0.0, %v531
    %v533 = vpop.f32.mrb[0].mxu0
    %534 = vmatprep.mubr.bf16.mxu0 0
    %535 = vmatmul.mubr.bf16.gmra.mrb[0].mxu0 %v239
    %v536 = vpop.f32.mrb[0].mxu0
    %v537 = vadd.f32 0.0, %v536
    %v538 = vpop.f32.mrb[0].mxu0
    %v539 = vpop.f32.mrb[0].mxu0
    %v540 = vadd.f32 0.0, %v539
    %v541 = vpop.f32.mrb[0].mxu0
    %542 = vmatprep.mubr.bf16.mxu0 0
    %543 = vmatmul.mubr.bf16.gmra.mrb[0].mxu0 %v242
    %v544 = vpop.f32.mrb[0].mxu0
    %v545 = vadd.f32 0.0, %v544
    %v546 = vpop.f32.mrb[0].mxu0
    %v547 = vpop.f32.mrb[0].mxu0
    %v548 = vadd.f32 0.0, %v547
    %v549 = vpop.f32.mrb[0].mxu0
    %550 = vmatprep.mubr.bf16.mxu0 0
    %551 = vmatmul.mubr.bf16.gmra.mrb[0].mxu0 %v245
    %v552 = vpop.f32.mrb[0].mxu0
    %v553 = vadd.f32 0.0, %v552
    %v554 = vpop.f32.mrb[0].mxu0
    %v555 = vpop.f32.mrb[0].mxu0
    %v556 = vadd.f32 0.0, %v555
    %v557 = vpop.f32.mrb[0].mxu0
    %558 = vmatprep.mubr.bf16.mxu0 0
    %559 = vmatmul.mubr.bf16.gmra.mrb[0].mxu0 %v248
    %v560 = vpop.f32.mrb[0].mxu0
    %v561 = vadd.f32 0.0, %v560
    %v562 = vpop.f32.mrb[0].mxu0
    %v563 = vpop.f32.mrb[0].mxu0
    %v564 = vadd.f32 0.0, %v563
    %v565 = vpop.f32.mrb[0].mxu0
    %566 = vmatprep.mubr.bf16.mxu0 0
    %567 = vmatmul.mubr.bf16.gmra.mrb[0].mxu0 %v251
    %v568 = vpop.f32.mrb[0].mxu0
    %v569 = vadd.f32 0.0, %v568
    %v570 = vpop.f32.mrb[0].mxu0
    %v571 = vpop.f32.mrb[0].mxu0
    %v572 = vadd.f32 0.0, %v571
    %v573 = vpop.f32.mrb[0].mxu0
    %574 = vdwg.mxu0
    %s575 = scalar_lea.vmem [#allocation10], 128
    %v576 = vld [vmem:[%s575] sm:$0xff]
    %v577 = vld [vmem:[%s575 + $0x8] sm:$0xff]
    %v578 = vld [vmem:[%s575 + $0x10] sm:$0xff]
    %v579 = vld [vmem:[%s575 + $0x18] sm:$0xff]
    %v580 = vld [vmem:[%s575 + $0x20] sm:$0xff]
    %v581 = vld [vmem:[%s575 + $0x28] sm:$0xff]
    %v582 = vld [vmem:[%s575 + $0x30] sm:$0xff]
    %v583 = vld [vmem:[%s575 + $0x38] sm:$0xff]
    %v584 = vld [vmem:[%s575 + $0x40] sm:$0xff]
    %v585 = vld [vmem:[%s575 + $0x48] sm:$0xff]
    %v586 = vld [vmem:[%s575 + $0x50] sm:$0xff]
    %v587 = vld [vmem:[%s575 + $0x58] sm:$0xff]
    %v588 = vld [vmem:[%s575 + $0x60] sm:$0xff]
    %v589 = vld [vmem:[%s575 + $0x68] sm:$0xff]
    %v590 = vld [vmem:[%s575 + $0x70] sm:$0xff]
    %v591 = vld [vmem:[%s575 + $0x78] sm:$0xff]
    %v592 = vadd.f32 %v576, %v513
    %v593 = vadd.f32 %v577, %v516
    %v594 = vadd.f32 %v578, %v521
    %v595 = vadd.f32 %v579, %v524
    %v596 = vadd.f32 %v580, %v529
    %v597 = vadd.f32 %v581, %v532
    %v598 = vadd.f32 %v582, %v537
    %v599 = vadd.f32 %v583, %v540
    %v600 = vadd.f32 %v584, %v545
    %v601 = vadd.f32 %v585, %v548
    %v602 = vadd.f32 %v586, %v553
    %v603 = vadd.f32 %v587, %v556
    %v604 = vadd.f32 %v588, %v561
    %v605 = vadd.f32 %v589, %v564
    %v606 = vadd.f32 %v590, %v569
    %v607 = vadd.f32 %v591, %v572
    %608 = vst [vmem:[%s575] sm:$0xff] %v592
    %609 = vst [vmem:[%s575 + $0x8] sm:$0xff] %v593
    %610 = vst [vmem:[%s575 + $0x10] sm:$0xff] %v594
    %611 = vst [vmem:[%s575 + $0x18] sm:$0xff] %v595
    %612 = vst [vmem:[%s575 + $0x20] sm:$0xff] %v596
    %613 = vst [vmem:[%s575 + $0x28] sm:$0xff] %v597
    %614 = vst [vmem:[%s575 + $0x30] sm:$0xff] %v598
    %615 = vst [vmem:[%s575 + $0x38] sm:$0xff] %v599
    %616 = vst [vmem:[%s575 + $0x40] sm:$0xff] %v600
    %617 = vst [vmem:[%s575 + $0x48] sm:$0xff] %v601
    %618 = vst [vmem:[%s575 + $0x50] sm:$0xff] %v602
    %619 = vst [vmem:[%s575 + $0x58] sm:$0xff] %v603
    %620 = vst [vmem:[%s575 + $0x60] sm:$0xff] %v604
    %621 = vst [vmem:[%s575 + $0x68] sm:$0xff] %v605
    %622 = vst [vmem:[%s575 + $0x70] sm:$0xff] %v606
    %623 = vst [vmem:[%s575 + $0x78] sm:$0xff] %v607
    // Predicated region
    $region42: #{tpu_custom_call.1} parent=1 // pred_check
      %p624 = pneg %p75
    $region43: #{tpu_custom_call.1} parent=1 // pred_check_branch
      %626 = sbr.rel (%p624) target = $region45
    $region44: #{tpu_custom_call.1} parent=1 // pred_region
      %v627 = vld [vmem:[#allocation10] sm:$0xff]
      %v628 = vld [vmem:[#allocation10 + $0x8] sm:$0xff]
      %v629 = vld [vmem:[#allocation10 + $0x10] sm:$0xff]
      %v630 = vld [vmem:[#allocation10 + $0x18] sm:$0xff]
      %v631 = vld [vmem:[#allocation10 + $0x20] sm:$0xff]
      %v632 = vld [vmem:[#allocation10 + $0x28] sm:$0xff]
      %v633 = vld [vmem:[#allocation10 + $0x30] sm:$0xff]
      %v634 = vld [vmem:[#allocation10 + $0x38] sm:$0xff]
      %v635 = vld [vmem:[#allocation10 + $0x40] sm:$0xff]
      %v636 = vld [vmem:[#allocation10 + $0x48] sm:$0xff]
      %v637 = vld [vmem:[#allocation10 + $0x50] sm:$0xff]
      %v638 = vld [vmem:[#allocation10 + $0x58] sm:$0xff]
      %v639 = vld [vmem:[#allocation10 + $0x60] sm:$0xff]
      %v640 = vld [vmem:[#allocation10 + $0x68] sm:$0xff]
      %v641 = vld [vmem:[#allocation10 + $0x70] sm:$0xff]
      %v642 = vld [vmem:[#allocation10 + $0x78] sm:$0xff]
      %v643 = vpack.c.bf16 %v628, %v627
      %v644 = vpack.c.bf16 %v630, %v629
      %v645 = vpack.c.bf16 %v632, %v631
      %v646 = vpack.c.bf16 %v634, %v633
      %v647 = vpack.c.bf16 %v636, %v635
      %v648 = vpack.c.bf16 %v638, %v637
      %v649 = vpack.c.bf16 %v640, %v639
      %v650 = vpack.c.bf16 %v642, %v641
      %v651 = vld [vmem:[#allocation8] sm:$0xf]
      %v652 = vld [vmem:[#allocation8 + $0x4] sm:$0xf]
      %v653 = vld [vmem:[#allocation8 + $0x8] sm:$0xf]
      %v654 = vld [vmem:[#allocation8 + $0xc] sm:$0xf]
      %v655 = vld [vmem:[#allocation8 + $0x10] sm:$0xf]
      %v656 = vld [vmem:[#allocation8 + $0x14] sm:$0xf]
      %v657 = vld [vmem:[#allocation8 + $0x18] sm:$0xf]
      %v658 = vld [vmem:[#allocation8 + $0x1c] sm:$0xf]
      %v659 = vld [vmem:[#allocation8 + $0x20] sm:$0xf]
      %v660 = vld [vmem:[#allocation8 + $0x24] sm:$0xf]
      %v661 = vld [vmem:[#allocation8 + $0x28] sm:$0xf]
      %v662 = vld [vmem:[#allocation8 + $0x2c] sm:$0xf]
      %v663 = vld [vmem:[#allocation8 + $0x30] sm:$0xf]
      %v664 = vld [vmem:[#allocation8 + $0x34] sm:$0xf]
      %v665 = vld [vmem:[#allocation8 + $0x38] sm:$0xf]
      %v666 = vld [vmem:[#allocation8 + $0x3c] sm:$0xf]
      %v683 = vunpack.c.l.b16 %v651
      %v684 = vunpack.c.l.b16 %v652
      %v685 = vunpack.c.l.b16 %v653
      %v686 = vunpack.c.l.b16 %v654
      %v687 = vunpack.c.l.b16 %v655
      %v688 = vunpack.c.l.b16 %v656
      %v689 = vunpack.c.l.b16 %v657
      %v690 = vunpack.c.l.b16 %v658
      %v691 = vunpack.c.l.b16 %v659
      %v692 = vunpack.c.l.b16 %v660
      %v693 = vunpack.c.l.b16 %v661
      %v694 = vunpack.c.l.b16 %v662
      %v695 = vunpack.c.l.b16 %v663
      %v696 = vunpack.c.l.b16 %v664
      %v697 = vunpack.c.l.b16 %v665
      %v698 = vunpack.c.l.b16 %v666
      %v699 = vpack.c.b16 %v684, %v683
      %v700 = vpack.c.b16 %v686, %v685
      %v701 = vpack.c.b16 %v688, %v687
      %v702 = vpack.c.b16 %v690, %v689
      %v703 = vpack.c.b16 %v692, %v691
      %v704 = vpack.c.b16 %v694, %v693
      %v705 = vpack.c.b16 %v696, %v695
      %v706 = vpack.c.b16 %v698, %v697
      %715 = vmatprep.subr.bf16.mxu0 0
      %716 = vmatpush1.bf16.msra.mxu0 %v699
      %717 = vmatprep.subr.bf16.mxu0 0
      %718 = vmatpush1.bf16.msra.mxu0 %v700
      %719 = vmatprep.subr.bf16.mxu0 0
      %720 = vmatpush1.bf16.msra.mxu0 %v701
      %721 = vmatprep.subr.bf16.mxu0 0
      %722 = vmatpush1.bf16.msra.mxu0 %v702
      %723 = vmatprep.subr.bf16.mxu0 0
      %724 = vmatpush1.bf16.msra.mxu0 %v703
      %725 = vmatprep.subr.bf16.mxu0 0
      %726 = vmatpush1.bf16.msra.mxu0 %v704
      %727 = vmatprep.subr.bf16.mxu0 0
      %728 = vmatpush1.bf16.msra.mxu0 %v705
      %729 = vmatprep.subr.bf16.mxu0 0
      %730 = vmatpush1.bf16.msra.mxu0 %v706
      %731 = vmatprep.subr.bf16.mxu0 0
      %732 = vmatpush1.bf16.msra.mxu0 0
      %733 = vmatprep.subr.bf16.mxu0 0
      %734 = vmatpush1.bf16.msra.mxu0 0
      %735 = vmatprep.subr.bf16.mxu0 0
      %736 = vmatpush1.bf16.msra.mxu0 0
      %737 = vmatprep.subr.bf16.mxu0 0
      %738 = vmatpush1.bf16.msra.mxu0 0
      %739 = vmatprep.subr.bf16.mxu0 0
      %740 = vmatpush1.bf16.msra.mxu0 0
      %741 = vmatprep.subr.bf16.mxu0 0
      %742 = vmatpush1.bf16.msra.mxu0 0
      %743 = vmatprep.subr.bf16.mxu0 0
      %744 = vmatpush1.bf16.msra.mxu0 0
      %745 = vmatprep.subr.bf16.mxu0 0
      %746 = vmatpush1.bf16.msra.mxu0 0
      %747 = vmatprep.mubr.bf16.mxu0 0
      %748 = vmatmul.mubr.bf16.gmra.mrb[0].mxu0 %v643
      %v749 = vpop.f32.mrb[0].mxu0
      %v750 = vadd.f32 0.0, %v749
      %v751 = vpop.f32.mrb[0].mxu0
      %v752 = vpop.f32.mrb[0].mxu0
      %v753 = vadd.f32 0.0, %v752
      %v754 = vpop.f32.mrb[0].mxu0
      %755 = vmatprep.mubr.bf16.mxu0 0
      %756 = vmatmul.mubr.bf16.gmra.mrb[0].mxu0 %v644
      %v757 = vpop.f32.mrb[0].mxu0
      %v758 = vadd.f32 0.0, %v757
      %v759 = vpop.f32.mrb[0].mxu0
      %v760 = vpop.f32.mrb[0].mxu0
      %v761 = vadd.f32 0.0, %v760
      %v762 = vpop.f32.mrb[0].mxu0
      %763 = vmatprep.mubr.bf16.mxu0 0
      %764 = vmatmul.mubr.bf16.gmra.mrb[0].mxu0 %v645
      %v765 = vpop.f32.mrb[0].mxu0
      %v766 = vadd.f32 0.0, %v765
      %v767 = vpop.f32.mrb[0].mxu0
      %v768 = vpop.f32.mrb[0].mxu0
      %v769 = vadd.f32 0.0, %v768
      %v770 = vpop.f32.mrb[0].mxu0
      %771 = vmatprep.mubr.bf16.mxu0 0
      %772 = vmatmul.mubr.bf16.gmra.mrb[0].mxu0 %v646
      %v773 = vpop.f32.mrb[0].mxu0
      %v774 = vadd.f32 0.0, %v773
      %v775 = vpop.f32.mrb[0].mxu0
      %v776 = vpop.f32.mrb[0].mxu0
      %v777 = vadd.f32 0.0, %v776
      %v778 = vpop.f32.mrb[0].mxu0
      %779 = vmatprep.mubr.bf16.mxu0 0
      %780 = vmatmul.mubr.bf16.gmra.mrb[0].mxu0 %v647
      %v781 = vpop.f32.mrb[0].mxu0
      %v782 = vadd.f32 0.0, %v781
      %v783 = vpop.f32.mrb[0].mxu0
      %v784 = vpop.f32.mrb[0].mxu0
      %v785 = vadd.f32 0.0, %v784
      %v786 = vpop.f32.mrb[0].mxu0
      %787 = vmatprep.mubr.bf16.mxu0 0
      %788 = vmatmul.mubr.bf16.gmra.mrb[0].mxu0 %v648
      %v789 = vpop.f32.mrb[0].mxu0
      %v790 = vadd.f32 0.0, %v789
      %v791 = vpop.f32.mrb[0].mxu0
      %v792 = vpop.f32.mrb[0].mxu0
      %v793 = vadd.f32 0.0, %v792
      %v794 = vpop.f32.mrb[0].mxu0
      %795 = vmatprep.mubr.bf16.mxu0 0
      %796 = vmatmul.mubr.bf16.gmra.mrb[0].mxu0 %v649
      %v797 = vpop.f32.mrb[0].mxu0
      %v798 = vadd.f32 0.0, %v797
      %v799 = vpop.f32.mrb[0].mxu0
      %v800 = vpop.f32.mrb[0].mxu0
      %v801 = vadd.f32 0.0, %v800
      %v802 = vpop.f32.mrb[0].mxu0
      %803 = vmatprep.mubr.bf16.mxu0 0
      %804 = vmatmul.mubr.bf16.gmra.mrb[0].mxu0 %v650
      %v805 = vpop.f32.mrb[0].mxu0
      %v806 = vadd.f32 0.0, %v805
      %v807 = vpop.f32.mrb[0].mxu0
      %v808 = vpop.f32.mrb[0].mxu0
      %v809 = vadd.f32 0.0, %v808
      %v810 = vpop.f32.mrb[0].mxu0
      %811 = vdwg.mxu0
      %812 = vst [vmem:[#allocation10] sm:$0xff] %v750
      %813 = vst [vmem:[#allocation10 + $0x8] sm:$0xff] %v753
      %814 = vst [vmem:[#allocation10 + $0x10] sm:$0xff] %v758
      %815 = vst [vmem:[#allocation10 + $0x18] sm:$0xff] %v761
      %816 = vst [vmem:[#allocation10 + $0x20] sm:$0xff] %v766
      %817 = vst [vmem:[#allocation10 + $0x28] sm:$0xff] %v769
      %818 = vst [vmem:[#allocation10 + $0x30] sm:$0xff] %v774
      %819 = vst [vmem:[#allocation10 + $0x38] sm:$0xff] %v777
      %820 = vst [vmem:[#allocation10 + $0x40] sm:$0xff] %v782
      %821 = vst [vmem:[#allocation10 + $0x48] sm:$0xff] %v785
      %822 = vst [vmem:[#allocation10 + $0x50] sm:$0xff] %v790
      %823 = vst [vmem:[#allocation10 + $0x58] sm:$0xff] %v793
      %824 = vst [vmem:[#allocation10 + $0x60] sm:$0xff] %v798
      %825 = vst [vmem:[#allocation10 + $0x68] sm:$0xff] %v801
      %826 = vst [vmem:[#allocation10 + $0x70] sm:$0xff] %v806
      %827 = vst [vmem:[#allocation10 + $0x78] sm:$0xff] %v809
    $region45: #{tpu_custom_call.1} parent=1 // pred_fallthru
      _
    // Predicated region
    $region46: #{tpu_custom_call.1} parent=1 // pred_check
      _
    $region47: #{tpu_custom_call.1} parent=1 // pred_check_branch
      %829 = sbr.rel (0) target = $region49
    $region48: #{tpu_custom_call.1} parent=1 // pred_region
      %s831 = ssub.s32 4096, 4096
      %832 = vsyncadd [#allocation4], %s831
      %s833 = sshll.u32 [#allocation10], 4
      %s834 = int_to_ptr.vmem [resolvable:$true] %s833
      %839 = dma.vmem_to_hbm [thread:$0]  %s834, 4096, %s5, [#allocation4], 128, 128, 8
    $region49: #{tpu_custom_call.1} parent=1 // pred_fallthru
      _
    // Predicated region
    $region50: #{tpu_custom_call.1} parent=1 // pred_check
      _
    $region51: #{tpu_custom_call.1} parent=1 // pred_check_branch
      %841 = sbr.rel (0) target = $region53
    $region52: #{tpu_custom_call.1} parent=1 // pred_region
      %842 = dma.done [#allocation4], 4096
    $region53: #{tpu_custom_call.1} parent=1 // pred_fallthru
      _
    %843 = vsyncpa [#allocation3], 1
    %844 = vsyncpa [#allocation6], 1
    %845 = vsyncpa [#allocation9], 1
    %846 = vsyncpa [#allocation4], 1

</llo_original>
